<compile_context>
chip_gen: v6e
topology: v6e:2x2x1
jax: 0.10.0
libtpu: 0.0.40
codegen_flags: <defaults>
</compile_context>

<pallas_src>
import jax
import jax.numpy as jnp
from jax.experimental import pallas as pl
from jax.experimental.pallas import tpu as pltpu


_LANE = 128
_VPU_CIN_CUTOFF = 16                     # Cin <= this: skip MXU, use VPU FMAs
_TILE_VMEM_BUDGET = 24 * 1024 * 1024     # bytes for double-buffered data tiles
_VMEM_LIMIT = 40 * 1024 * 1024           # explicit scoped-VMEM limit
_MAX_HW_TILE = 32768                     # lanes per step (already multi-MiB DMAs)


def _cdiv(a, b):
    return -(-a // b)


def _conv1x1_kernel(x_ref, w_ref, b_ref, o_ref):
    """o = w @ x + b, lane-dense over the pixel axis.

    x_ref: (Cin, T)   w_ref: (CoutT, Cin)   b_ref: (CoutT, 1)   o_ref: (CoutT, T)
    """
    x = x_ref[...]
    w = w_ref[...]
    b = b_ref[...].astype(jnp.float32)
    cin, t = x.shape
    cout = w.shape[0]

    if cin <= _VPU_CIN_CUTOFF:
        # VPU path: Cin unrolled broadcast multiply-adds. The accumulator is
        # initialized with the broadcast bias (hoisted once), removing the
        # separate "+ bias" pass over the (Cout, T) tile.
        xf = x.astype(jnp.float32)
        wf = w.astype(jnp.float32)
        acc = jnp.broadcast_to(b, (cout, t))
        for c in range(cin):                       # static unroll (trace-time Cin)
            acc = acc + wf[:, c:c + 1] * xf[c:c + 1, :]
    else:
        # MXU path: lane-dense (CoutT, T) result with f32 accumulation.
        acc = jnp.dot(w, x, preferred_element_type=jnp.float32) + b

    o_ref[...] = acc.astype(o_ref.dtype)


def _conv1x1_pallas_core(x3d, w2d, bias2d):
    """x3d: (N, Cin, HW); w2d: (Cout, Cin); bias2d: (Cout, 1) -> (N, Cout, HW)."""
    N, Cin, HW = x3d.shape
    Cout = w2d.shape[0]
    itemsize = jnp.dtype(x3d.dtype).itemsize

    # Cout tiling only for very wide 1x1 convs; keeps weight block + output
    # tile inside the VMEM budget without shrinking hw_tile.
    cout_tile = Cout if Cout <= 512 else 256       # 256 is a multiple of 8
    n_co = _cdiv(Cout, cout_tile)

    # hw_tile from the VMEM budget: 2x (double buffer) * (input + output) tile
    # bytes per lane, after subtracting the resident weight/bias buffers.
    w_bytes = 2 * (cout_tile * Cin + cout_tile) * itemsize
    lane_budget = max(_TILE_VMEM_BUDGET - w_bytes, 1 << 20)
    per_lane = 2 * (Cin + cout_tile) * itemsize
    hw_tile = min(lane_budget // per_lane, _MAX_HW_TILE)
    if hw_tile >= HW:
        hw_tile = HW                               # single full-extent block
    else:
        hw_tile = max(_LANE, (hw_tile // _LANE) * _LANE)

    # v7x has 2 TensorCores: make sure a single-image call still yields >= 2
    # parallel grid steps (no effect on single-TC v5e/v6e).
    if N == 1 and n_co == 1 and hw_tile >= HW and HW > _LANE:
        hw_tile = _LANE * _cdiv(_cdiv(HW, 2), _LANE)

    n_hw = _cdiv(HW, hw_tile)
    grid = (N, n_hw, n_co)                         # cout innermost: x tile reused

    cost = pl.CostEstimate(
        flops=2 * N * Cout * Cin * HW,
        transcendentals=0,
        bytes_accessed=itemsize * (N * (Cin + Cout) * HW + Cout * Cin + Cout),
    )

    return pl.pallas_call(
        _conv1x1_kernel,
        out_shape=jax.ShapeDtypeStruct((N, Cout, HW), x3d.dtype),
        grid_spec=pltpu.PrefetchScalarGridSpec(
            num_scalar_prefetch=0,
            grid=grid,
            in_specs=[
                # Activation tile (batch dim squeezed). Block index is constant
                # across the innermost cout axis -> no re-DMA while sweeping
                # output-channel tiles.
                pl.BlockSpec((None, Cin, hw_tile), lambda n, j, co: (n, 0, j)),
                # Weight / bias: constant block index per cout-tile, so for the
                # common n_co == 1 case they stay resident across all steps.
                pl.BlockSpec((cout_tile, Cin), lambda n, j, co: (co, 0)),
                pl.BlockSpec((cout_tile, 1), lambda n, j, co: (co, 0)),
            ],
            out_specs=pl.BlockSpec((None, cout_tile, hw_tile),
                                   lambda n, j, co: (n, co, j)),
        ),
        compiler_params=pltpu.CompilerParams(
            dimension_semantics=("parallel", "parallel", "parallel"),
            vmem_limit_bytes=_VMEM_LIMIT,
        ),
        cost_estimate=cost,
    )(x3d, w2d, bias2d)


def conv1x1_pallas(x3d, weight2d, bias):
    """x3d: (N, Cin, HW); weight2d: (Cout, Cin); bias: (Cout,) -> (N, Cout, HW)."""
    N, Cin, HW = x3d.shape
    Cout = weight2d.shape[0]
    bias2d = bias.reshape(Cout, 1)

    if HW < _LANE and N > 1:
        # Tiny crops: pack the batch into the lane axis so the output tile is
        # lane-dense (>= 128 wide, unmasked stores) and the conv is a single
        # grid step. The wrapper transposes touch only a few KiB.
        xp = jnp.transpose(x3d, (1, 0, 2)).reshape(1, Cin, N * HW)
        yp = _conv1x1_pallas_core(xp, weight2d, bias2d)        # (1, Cout, N*HW)
        return jnp.transpose(yp.reshape(Cout, N, HW), (1, 0, 2))

    return _conv1x1_pallas_core(x3d, weight2d, bias2d)


def center_crop_nchw(x, size):
    """Matches torchvision CenterCrop for the (input >= crop) case."""
    # TODO(synk): torchvision pads when the crop is larger than the input; that
    # branch is not implemented here.
    N, C, H, W = x.shape
    top = int(round((H - size) / 2.0))
    left = int(round((W - size) / 2.0))
    return x[:, :, top:top + size, left:left + size]


def sample_module_forward(x_nchw, weight, bias, s_out):
    """SampleModule.forward: CenterCrop(s_out) -> Conv2d(c_in, c_out, k=1)."""
    xc = center_crop_nchw(x_nchw, s_out)          # XLA slice, stays NCHW
    N, Cin, Hc, Wc = xc.shape
    Cout = weight.shape[0]
    x3d = xc.reshape(N, Cin, Hc * Wc)             # row-major reshape (no transpose)
    w2d = weight.reshape(Cout, Cin)               # (Cout, Cin, 1, 1) -> (Cout, Cin)
    y3d = conv1x1_pallas(x3d, w2d, bias)          # Pallas hot path, NCHW-native
    return y3d.reshape(N, Cout, Hc, Wc)           # free reshape back to NCHW


def _reference(x, weight, bias, s_out):
    xc = center_crop_nchw(x, s_out)
    c_out, c_in = weight.shape[0], weight.shape[1]
    return (jnp.einsum("nchw,oc->nohw", xc, weight.reshape(c_out, c_in))
            + bias.reshape(1, c_out, 1, 1))


if __name__ == "__main__":
    key = jax.random.PRNGKey(0)
    kx, kw, kb, kx2 = jax.random.split(key, 4)

    # --- Demo 1: module-sized shapes (crop 16 -> 8, channels 4 -> 8). -------
    N, C_IN, H, W = 2, 4, 16, 16
    C_OUT, S_OUT = 8, 8
    x = jax.random.normal(kx, (N, C_IN, H, W), dtype=jnp.float32)

    fan_in = C_IN * 1 * 1
    wbound = (6.0 / fan_in) ** 0.5
    bbound = 1.0 / (fan_in ** 0.5)
    weight = jax.random.uniform(kw, (C_OUT, C_IN, 1, 1), jnp.float32,
                                -wbound, wbound)
    bias = jax.random.uniform(kb, (C_OUT,), jnp.float32, -bbound, bbound)

    y = sample_module_forward(x, weight, bias, S_OUT)
    jax.block_until_ready(y)
    y_ref = _reference(x, weight, bias, S_OUT)
    assert y.shape == (N, C_OUT, S_OUT, S_OUT)
    assert jnp.allclose(y, y_ref, atol=1e-5, rtol=1e-5)

    # --- Demo 2: single-image, larger crop -> exercises the tiled/split grid
    # path (N == 1, HW = 256 splits into 2 parallel steps for v7x megacore). --
    x2 = jax.random.normal(kx2, (1, C_IN, 32, 32), dtype=jnp.float32)
    y2 = sample_module_forward(x2, weight, bias, 16)
    jax.block_until_ready(y2)
    y2_ref = _reference(x2, weight, bias, 16)
    assert y2.shape == (1, C_OUT, 16, 16)
    assert jnp.allclose(y2, y2_ref, atol=1e-5, rtol=1e-5)

    print("KERNEL_OK")
</pallas_src>

<mosaic_0001>
module attributes {stable_mosaic.version = 11 : i64} {
  func.func @_conv1x1_kernel(%arg0: i32, %arg1: i32, %arg2: i32, %arg3: memref<1x4x128xf32, #tpu.memory_space<vmem>>, %arg4: memref<8x4xf32, #tpu.memory_space<vmem>>, %arg5: memref<8x1xf32, #tpu.memory_space<vmem>>, %arg6: memref<1x8x128xf32, #tpu.memory_space<vmem>>) attributes {dimension_semantics = [#tpu.dimension_semantics<parallel>, #tpu.dimension_semantics<parallel>, #tpu.dimension_semantics<parallel>], iteration_bounds = array<i64: 1, 1, 1>, scalar_prefetch = 0 : i64, scratch_operands = 0 : i64, tpu.core_type = #tpu.core_type<tc>, window_params = [{transform_indices = @transform_0, window_bounds = array<i64: 1, 4, 128>}, {transform_indices = @transform_1, window_bounds = array<i64: 8, 4>}, {transform_indices = @transform_2, window_bounds = array<i64: 8, 1>}, {transform_indices = @transform_3, window_bounds = array<i64: 1, 8, 128>}]} {
    %c0 = arith.constant 0 : index
    %c0_0 = arith.constant 0 : index
    %c0_1 = arith.constant 0 : index
    %0 = vector.load %arg3[%c0, %c0_0, %c0_1] : memref<1x4x128xf32, #tpu.memory_space<vmem>>, vector<1x4x128xf32>
    %1 = vector.shape_cast %0 : vector<1x4x128xf32> to vector<4x128xf32>
    %c0_2 = arith.constant 0 : index
    %c0_3 = arith.constant 0 : index
    %2 = vector.load %arg4[%c0_2, %c0_3] : memref<8x4xf32, #tpu.memory_space<vmem>>, vector<8x4xf32>
    %c0_4 = arith.constant 0 : index
    %c0_5 = arith.constant 0 : index
    %3 = vector.load %arg5[%c0_4, %c0_5] : memref<8x1xf32, #tpu.memory_space<vmem>>, vector<8x1xf32>
    %4 = vector.shape_cast %3 : vector<8x1xf32> to vector<8x1xf32>
    %5 = vector.broadcast %4 : vector<8x1xf32> to vector<8x128xf32>
    %6 = vector.extract_strided_slice %2 {offsets = [0, 0], sizes = [8, 1], strides = [1, 1]} : vector<8x4xf32> to vector<8x1xf32>
    %7 = vector.extract_strided_slice %1 {offsets = [0, 0], sizes = [1, 128], strides = [1, 1]} : vector<4x128xf32> to vector<1x128xf32>
    %8 = vector.broadcast %6 : vector<8x1xf32> to vector<8x128xf32>
    %9 = vector.broadcast %7 : vector<1x128xf32> to vector<8x128xf32>
    %10 = arith.mulf %8, %9 : vector<8x128xf32>
    %11 = arith.addf %5, %10 : vector<8x128xf32>
    %12 = vector.extract_strided_slice %2 {offsets = [0, 1], sizes = [8, 1], strides = [1, 1]} : vector<8x4xf32> to vector<8x1xf32>
    %13 = vector.extract_strided_slice %1 {offsets = [1, 0], sizes = [1, 128], strides = [1, 1]} : vector<4x128xf32> to vector<1x128xf32>
    %14 = vector.broadcast %12 : vector<8x1xf32> to vector<8x128xf32>
    %15 = vector.broadcast %13 : vector<1x128xf32> to vector<8x128xf32>
    %16 = arith.mulf %14, %15 : vector<8x128xf32>
    %17 = arith.addf %11, %16 : vector<8x128xf32>
    %18 = vector.extract_strided_slice %2 {offsets = [0, 2], sizes = [8, 1], strides = [1, 1]} : vector<8x4xf32> to vector<8x1xf32>
    %19 = vector.extract_strided_slice %1 {offsets = [2, 0], sizes = [1, 128], strides = [1, 1]} : vector<4x128xf32> to vector<1x128xf32>
    %20 = vector.broadcast %18 : vector<8x1xf32> to vector<8x128xf32>
    %21 = vector.broadcast %19 : vector<1x128xf32> to vector<8x128xf32>
    %22 = arith.mulf %20, %21 : vector<8x128xf32>
    %23 = arith.addf %17, %22 : vector<8x128xf32>
    %24 = vector.extract_strided_slice %2 {offsets = [0, 3], sizes = [8, 1], strides = [1, 1]} : vector<8x4xf32> to vector<8x1xf32>
    %25 = vector.extract_strided_slice %1 {offsets = [3, 0], sizes = [1, 128], strides = [1, 1]} : vector<4x128xf32> to vector<1x128xf32>
    %26 = vector.broadcast %24 : vector<8x1xf32> to vector<8x128xf32>
    %27 = vector.broadcast %25 : vector<1x128xf32> to vector<8x128xf32>
    %28 = arith.mulf %26, %27 : vector<8x128xf32>
    %29 = arith.addf %23, %28 : vector<8x128xf32>
    %c0_6 = arith.constant 0 : index
    %c0_7 = arith.constant 0 : index
    %c0_8 = arith.constant 0 : index
    %30 = vector.load %arg6[%c0_6, %c0_7, %c0_8] : memref<1x8x128xf32, #tpu.memory_space<vmem>>, vector<1x8x128xf32>
    %31 = vector.shape_cast %30 : vector<1x8x128xf32> to vector<8x128xf32>
    %32 = vector.shape_cast %29 : vector<8x128xf32> to vector<1x8x128xf32>
    tpu.vector_store %arg6[%c0_6, %c0_7, %c0_8], %32 {strides = array<i32>} : memref<1x8x128xf32, #tpu.memory_space<vmem>>, vector<1x8x128xf32>,
    return
  }
  func.func @transform_0(%arg0: i32, %arg1: i32, %arg2: i32) -> (i32, i32, i32) {
    %c0_i32 = arith.constant 0 : i32
    %c0_i32_0 = arith.constant 0 : i32
    return %arg0, %c0_i32, %arg1 : i32, i32, i32
  }
  func.func @transform_1(%arg0: i32, %arg1: i32, %arg2: i32) -> (i32, i32) {
    %c0_i32 = arith.constant 0 : i32
    %c0_i32_0 = arith.constant 0 : i32
    return %arg2, %c0_i32 : i32, i32
  }
  func.func @transform_2(%arg0: i32, %arg1: i32, %arg2: i32) -> (i32, i32) {
    %c0_i32 = arith.constant 0 : i32
    %c0_i32_0 = arith.constant 0 : i32
    return %arg2, %c0_i32 : i32, i32
  }
  func.func @transform_3(%arg0: i32, %arg1: i32, %arg2: i32) -> (i32, i32, i32) {
    %c0_i32 = arith.constant 0 : i32
    return %arg0, %arg2, %arg1 : i32, i32, i32
  }
}

</mosaic_0001>

<llo_original>
// kernel: tpu_custom_call.1
$region0: #{tpu_custom_call.1}
  #allocation0 [shape = 'u32[]', space=smem, size = 0x4, offset = 0x4, fixed_abs, tag = 'smem constant byte address 0x4 - core index']
  #allocation1 [shape = 'u32[144,128]{1,0:T(1,128)}', space=vmem, size = 0x12000, scoped, tag = 'internal scratch']
  %s0 = inlined_call_operand.vmem [shape: f32[1,4,128], index: 0, kind: input, shape index: {}]
  %s1 = inlined_call_operand.vmem [shape: f32[8,4], index: 1, kind: input, shape index: {}]
  %s2 = inlined_call_operand.vmem [shape: f32[8,1], index: 2, kind: input, shape index: {}]
  %s3 = inlined_call_operand.hbm [shape: f32[1,8,128], index: 3, kind: output, shape index: {}]
  %s4 = sld [smem:[#allocation0]]
  $region22: #{tpu_custom_call.1} parent=0
    _
  %s6 = ssub.s32 1, %s4
  %s7 = scalar_select 0, %s6, %s4
  $region1: #{tpu_custom_call.1} parent=0
    #allocation2 [shape = 'u8[4096]{0}', space=vmem, size = 0x1000, scoped, tag = 'output window, operand 0, single buffered']
    #allocation3 [shape = 's32[1]{0}', space=sflag, size = 0x4, scoped, tag = 'scoped memory for tpu_custom_call.1']
    %8 = vsyncpa [#allocation3], 0
    // Predicated region
    $region2: #{tpu_custom_call.1} parent=1 // pred_check
      _
    $region3: #{tpu_custom_call.1} parent=1 // pred_check_branch
      %10 = sbr.rel (0) target = $region5
    $region4: #{tpu_custom_call.1} parent=1 // pred_region
      _
    $region5: #{tpu_custom_call.1} parent=1 // pred_fallthru
      _
    // Predicated region
    $region6: #{tpu_custom_call.1} parent=1 // pred_check
      _
    $region7: #{tpu_custom_call.1} parent=1 // pred_check_branch
      %12 = sbr.rel (0) target = $region9
    $region8: #{tpu_custom_call.1} parent=1 // pred_region
      _
    $region9: #{tpu_custom_call.1} parent=1 // pred_fallthru
      _
    // Predicated region
    $region10: #{tpu_custom_call.1} parent=1 // pred_check
      _
    $region11: #{tpu_custom_call.1} parent=1 // pred_check_branch
      %14 = sbr.rel (0) target = $region13
    $region12: #{tpu_custom_call.1} parent=1 // pred_region
      _
    $region13: #{tpu_custom_call.1} parent=1 // pred_fallthru
      _
    %v15 = vld [vmem:[%s0] sm:$0xf]
    %v16 = vld [vmem:[%s1] sm:$0xff]
    %v17 = vld [vmem:[%s2] sm:$0xff]
    %19 = vset.pattern.permute.xlu0 0
    %20 = vperm.xlu0 %19, %v17
    %v21 = vpop.permute.xlu0 %20
    %24 = vset.pattern.permute.xlu0 0
    %25 = vperm.xlu0 %24, %v16
    %v26 = vpop.permute.xlu0 %25
    %v28 = vlaneseq
    %v29 = vshrl.u32 %v28, 7
    %v30 = vsub.s32 0, %v29
    %v31 = vrot.slane %v15, %v30
    %v32 = vmul.f32 %v26, %v31
    %v33 = vadd.f32 %v21, %v32
    %34 = vset.pattern.permute.xlu0 1
    %35 = vperm.xlu0 %34, %v16
    %v36 = vpop.permute.xlu0 %35
    %v38 = vlaneseq
    %v39 = vshrl.u32 %v38, 7
    %v40 = vsub.s32 1, %v39
    %v41 = vrot.slane %v15, %v40
    %v42 = vmul.f32 %v36, %v41
    %v43 = vadd.f32 %v33, %v42
    %44 = vset.pattern.permute.xlu0 2
    %45 = vperm.xlu0 %44, %v16
    %v46 = vpop.permute.xlu0 %45
    %v48 = vlaneseq
    %v49 = vshrl.u32 %v48, 7
    %v50 = vsub.s32 2, %v49
    %v51 = vrot.slane %v15, %v50
    %v52 = vmul.f32 %v46, %v51
    %v53 = vadd.f32 %v43, %v52
    %54 = vset.pattern.permute.xlu0 3
    %55 = vperm.xlu0 %54, %v16
    %v56 = vpop.permute.xlu0 %55
    %v58 = vlaneseq
    %v59 = vshrl.u32 %v58, 7
    %v60 = vsub.s32 3, %v59
    %v61 = vrot.slane %v15, %v60
    %v62 = vmul.f32 %v56, %v61
    %v63 = vadd.f32 %v53, %v62
    %64 = vst [vmem:[#allocation2] sm:$0xff] %v63
    // Predicated region
    $region14: #{tpu_custom_call.1} parent=1 // pred_check
      _
    $region15: #{tpu_custom_call.1} parent=1 // pred_check_branch
      %66 = sbr.rel (0) target = $region17
    $region16: #{tpu_custom_call.1} parent=1 // pred_region
      %s68 = ssub.s32 128, 128
      %69 = vsyncadd [#allocation3], %s68
      %s71 = sshll.u32 [#allocation2], 4
      %s72 = int_to_ptr.vmem [resolvable:$true] %s71
      %74 = dma.vmem_to_hbm [thread:$0]  %s72, 128, %s3, [#allocation3]
    $region17: #{tpu_custom_call.1} parent=1 // pred_fallthru
      _
    // Predicated region
    $region18: #{tpu_custom_call.1} parent=1 // pred_check
      _
    $region19: #{tpu_custom_call.1} parent=1 // pred_check_branch
      %76 = sbr.rel (0) target = $region21
    $region20: #{tpu_custom_call.1} parent=1 // pred_region
      %77 = dma.done [#allocation3], 128
    $region21: #{tpu_custom_call.1} parent=1 // pred_fallthru
      _
    %78 = vsyncpa [#allocation3], 1

</llo_original>
